<compile_context>
chip_gen: v6e
topology: v6e:2x2x1
jax: 0.10.0
libtpu: 0.0.40
codegen_flags: <defaults>
</compile_context>

<pallas_src>
import jax
import jax.numpy as jnp
import numpy as np
from jax.experimental import pallas as pl
from jax.experimental.pallas import tpu as pltpu


def _pos_embed_kernel(col_t_ref, row_t_ref, e_col_ref, e_row_ref, out_ref):
    """Writes one lane tile of the flattened (2F, H*W) position embedding.

    col_t_ref: (F, W)          col_embed.weight[:W].T
    row_t_ref: (F, H)          row_embed.weight[:H].T
    e_col_ref: (W, lane_tile)  0/1 expansion: e_col[w, p] = (p %  W == w)
    e_row_ref: (H, lane_tile)  0/1 expansion: e_row[h, p] = (p // W == h)
    out_ref:   (2F, lane_tile) out[f, p]   = col_t[f, p %  W]   (f <  F)
                               out[F+f, p] = row_t[f, p // W]   (f <  F)
    """
    f = col_t_ref.shape[0]
    # Replication as two MXU matmuls against constant one-hot matrices —
    # produces lane-dense f32 directly, no cross-lane XLU/VALU assembly.
    col_half = jnp.dot(
        col_t_ref[...], e_col_ref[...],
        preferred_element_type=jnp.float32,
        precision=jax.lax.Precision.HIGHEST,
    )
    row_half = jnp.dot(
        row_t_ref[...], e_row_ref[...],
        preferred_element_type=jnp.float32,
        precision=jax.lax.Precision.HIGHEST,
    )
    out_ref[0:f, :] = col_half.astype(out_ref.dtype)
    out_ref[f:2 * f, :] = row_half.astype(out_ref.dtype)


def position_embedding_learned(x, row_weight, col_weight, *, out_dtype=None,
                               max_lane_tile=4096):
    """x: (B, C, H, W) int indices (only the shape is used, as in the module).
    row_weight / col_weight: (num_clips, num_pos_feats) float tables.
    returns pos: (B, 2*num_pos_feats, H, W).
    """
    b = x.shape[0]
    h, w = int(x.shape[-2]), int(x.shape[-1])
    num_clips, feats = row_weight.shape
    assert h <= num_clips and w <= num_clips
    assert feats % 8 == 0  # sublane-friendly channel-half (true for default 256)
    out_dtype = row_weight.dtype if out_dtype is None else out_dtype

    hw = h * w
    # Lane tiling: whole H*W when it fits comfortably, else 128-aligned tiles.
    if hw <= max_lane_tile:
        lane_tile = hw
        num_tiles = 1
    else:
        lane_tile = max(128, max_lane_tile - (max_lane_tile % 128))
        num_tiles = pl.cdiv(hw, lane_tile)

    # One-time layout prep (tiny): slice tables to the rows actually used and
    # put features on the sublane axis -> no in-kernel transpose or slicing.
    col_t = jnp.transpose(col_weight[:w], (1, 0))  # (F, W)
    row_t = jnp.transpose(row_weight[:h], (1, 0))  # (F, H)

    # Constant 0/1 expansion matrices (host-built, small vs. the output).
    p = np.arange(hw)
    e_col = jnp.asarray(p[None, :] % w == np.arange(w)[:, None],
                        dtype=row_weight.dtype)   # (W, H*W)
    e_row = jnp.asarray(p[None, :] // w == np.arange(h)[:, None],
                        dtype=row_weight.dtype)   # (H, H*W)

    # Explicit scoped-VMEM budget (double-buffered blocks + in-kernel temps),
    # so the feats=256 / large-map config stays safe on v7x's 64 MiB VMEM.
    est_bytes = ((2 * feats + w + h) * lane_tile * 4 * 2      # out + E blocks, x2 buf
                 + feats * (w + h) * 4 * 2                    # tables, x2 buf
                 + 2 * feats * lane_tile * 4)                 # matmul temps
    vmem_limit = int(min(max(32 << 20, est_bytes + (4 << 20)), 128 << 20))

    flat = pl.pallas_call(
        _pos_embed_kernel,
        out_shape=jax.ShapeDtypeStruct((2 * feats, hw), out_dtype),
        grid=(num_tiles,),
        in_specs=[
            pl.BlockSpec((feats, w), lambda i: (0, 0)),
            pl.BlockSpec((feats, h), lambda i: (0, 0)),
            pl.BlockSpec((w, lane_tile), lambda i: (0, i)),
            pl.BlockSpec((h, lane_tile), lambda i: (0, i)),
        ],
        # Lane-dense output: last dim is H*W (or a 128-multiple tile of it);
        # lane tiles are independent -> "parallel" lets v7x megacore split them.
        out_specs=pl.BlockSpec((2 * feats, lane_tile), lambda i: (0, i)),
        compiler_params=pltpu.CompilerParams(
            dimension_semantics=("parallel",),
            vmem_limit_bytes=vmem_limit,
        ),
    )(col_t, row_t, e_col, e_row)

    # (2F, H*W) -> (2F, H, W) is a metadata reshape; the batch dim is a lazy
    # broadcast (fuses into the consumer under jit) matching torch's repeat
    # semantics without B-times the kernel's HBM traffic.
    pos = flat.reshape(2 * feats, h, w)
    return jnp.broadcast_to(pos[None], (b, 2 * feats, h, w))


def _reference(x, row_weight, col_weight):
    b, h, w = x.shape[0], x.shape[-2], x.shape[-1]
    f = row_weight.shape[1]
    x_emb = col_weight[jnp.arange(w)]  # (W, F)
    y_emb = row_weight[jnp.arange(h)]  # (H, F)
    pos = jnp.concatenate(
        [
            jnp.broadcast_to(x_emb[None, :, :], (h, w, f)),
            jnp.broadcast_to(y_emb[:, None, :], (h, w, f)),
        ],
        axis=-1,
    )  # (H, W, 2F)
    pos = jnp.transpose(pos, (2, 0, 1))[None]  # (1, 2F, H, W)
    return jnp.broadcast_to(pos, (b,) + pos.shape[1:])


if __name__ == "__main__":
    key = jax.random.PRNGKey(0)
    k_row, k_col, k_x = jax.random.split(key, 3)

    num_pos_feats, num_clips = 32, 32
    B, C, H, W = 2, 4, 16, 16

    # Deterministic init matching nn.init.uniform_ (U[0, 1)) on (num_clips, F).
    row_weight = jax.random.uniform(k_row, (num_clips, num_pos_feats), jnp.float32)
    col_weight = jax.random.uniform(k_col, (num_clips, num_pos_feats), jnp.float32)
    x = jax.random.randint(k_x, (B, C, H, W), 0, num_clips, dtype=jnp.int32)

    pos = position_embedding_learned(x, row_weight, col_weight)
    pos = jax.block_until_ready(pos)

    ref = _reference(x, row_weight, col_weight)
    # HIGHEST-precision one-hot contraction reproduces the f32 tables; keep a
    # tiny tolerance to be robust to ulp-level MXU decomposition rounding.
    np.testing.assert_allclose(np.asarray(pos), np.asarray(ref),
                               rtol=1e-6, atol=1e-6)
    assert pos.shape == (B, 2 * num_pos_feats, H, W)

    print("KERNEL_OK")
</pallas_src>

<mosaic_0001>
module attributes {stable_mosaic.version = 11 : i64} {
  func.func @_pos_embed_kernel(%arg0: i32, %arg1: memref<32x16xf32, #tpu.memory_space<vmem>>, %arg2: memref<32x16xf32, #tpu.memory_space<vmem>>, %arg3: memref<16x256xf32, #tpu.memory_space<vmem>>, %arg4: memref<16x256xf32, #tpu.memory_space<vmem>>, %arg5: memref<64x256xf32, #tpu.memory_space<vmem>>) attributes {dimension_semantics = [#tpu.dimension_semantics<parallel>], iteration_bounds = array<i64: 1>, scalar_prefetch = 0 : i64, scratch_operands = 0 : i64, tpu.core_type = #tpu.core_type<tc>, window_params = [{pipeline_mode = #tpu.pipeline_mode<synchronous>, transform_indices = @transform_0, window_bounds = array<i64: 32, 16>}, {pipeline_mode = #tpu.pipeline_mode<synchronous>, transform_indices = @transform_1, window_bounds = array<i64: 32, 16>}, {transform_indices = @transform_2, window_bounds = array<i64: 16, 256>}, {transform_indices = @transform_3, window_bounds = array<i64: 16, 256>}, {transform_indices = @transform_4, window_bounds = array<i64: 64, 256>}]} {
    %c0 = arith.constant 0 : index
    %c0_0 = arith.constant 0 : index
    %0 = vector.load %arg1[%c0, %c0_0] : memref<32x16xf32, #tpu.memory_space<vmem>>, vector<32x16xf32>
    %c0_1 = arith.constant 0 : index
    %c0_2 = arith.constant 0 : index
    %1 = vector.load %arg3[%c0_1, %c0_2] : memref<16x256xf32, #tpu.memory_space<vmem>>, vector<16x256xf32>
    %cst = arith.constant dense<0.000000e+00> : vector<32x256xf32>
    %2 = tpu.matmul %0, %1, %cst {dimension_numbers = #tpu.dot_dimension_numbers<[1], [0], [0], [1], [0, 0, 1, 1], [], []>, precision = #tpu.contract_precision<fp32>} : vector<32x16xf32>, vector<16x256xf32>, vector<32x256xf32> -> vector<32x256xf32>
    %c0_3 = arith.constant 0 : index
    %c0_4 = arith.constant 0 : index
    %3 = vector.load %arg2[%c0_3, %c0_4] : memref<32x16xf32, #tpu.memory_space<vmem>>, vector<32x16xf32>
    %c0_5 = arith.constant 0 : index
    %c0_6 = arith.constant 0 : index
    %4 = vector.load %arg4[%c0_5, %c0_6] : memref<16x256xf32, #tpu.memory_space<vmem>>, vector<16x256xf32>
    %cst_7 = arith.constant dense<0.000000e+00> : vector<32x256xf32>
    %5 = tpu.matmul %3, %4, %cst_7 {dimension_numbers = #tpu.dot_dimension_numbers<[1], [0], [0], [1], [0, 0, 1, 1], [], []>, precision = #tpu.contract_precision<fp32>} : vector<32x16xf32>, vector<16x256xf32>, vector<32x256xf32> -> vector<32x256xf32>
    %c0_8 = arith.constant 0 : index
    %c0_9 = arith.constant 0 : index
    %6 = vector.load %arg5[%c0_8, %c0_9] : memref<64x256xf32, #tpu.memory_space<vmem>>, vector<32x256xf32>
    tpu.vector_store %arg5[%c0_8, %c0_9], %2 {strides = array<i32>} : memref<64x256xf32, #tpu.memory_space<vmem>>, vector<32x256xf32>,
    %c32 = arith.constant 32 : index
    %c0_10 = arith.constant 0 : index
    %7 = vector.load %arg5[%c32, %c0_10] : memref<64x256xf32, #tpu.memory_space<vmem>>, vector<32x256xf32>
    tpu.vector_store %arg5[%c32, %c0_10], %5 {strides = array<i32>} : memref<64x256xf32, #tpu.memory_space<vmem>>, vector<32x256xf32>,
    return
  }
  func.func @transform_0(%arg0: i32) -> (i32, i32) {
    %c0_i32 = arith.constant 0 : i32
    %c0_i32_0 = arith.constant 0 : i32
    %c0_i32_1 = arith.constant 0 : i32
    return %c0_i32, %c0_i32_0 : i32, i32
  }
  func.func @transform_1(%arg0: i32) -> (i32, i32) {
    %c0_i32 = arith.constant 0 : i32
    %c0_i32_0 = arith.constant 0 : i32
    %c0_i32_1 = arith.constant 0 : i32
    return %c0_i32, %c0_i32_0 : i32, i32
  }
  func.func @transform_2(%arg0: i32) -> (i32, i32) {
    %c0_i32 = arith.constant 0 : i32
    %c0_i32_0 = arith.constant 0 : i32
    return %c0_i32, %arg0 : i32, i32
  }
  func.func @transform_3(%arg0: i32) -> (i32, i32) {
    %c0_i32 = arith.constant 0 : i32
    %c0_i32_0 = arith.constant 0 : i32
    return %c0_i32, %arg0 : i32, i32
  }
  func.func @transform_4(%arg0: i32) -> (i32, i32) {
    %c0_i32 = arith.constant 0 : i32
    %c0_i32_0 = arith.constant 0 : i32
    return %c0_i32, %arg0 : i32, i32
  }
}

</mosaic_0001>

<llo_original>
// kernel: tpu_custom_call.1
$region0: #{tpu_custom_call.1}
  #allocation0 [shape = 'u32[]', space=smem, size = 0x4, offset = 0x4, fixed_abs, tag = 'smem constant byte address 0x4 - core index']
  #allocation1 [shape = 'u32[144,128]{1,0:T(1,128)}', space=vmem, size = 0x12000, scoped, tag = 'internal scratch']
  %s0 = inlined_call_operand.vmem [shape: f32[32,16], index: 0, kind: input, shape index: {}]
  %s1 = inlined_call_operand.vmem [shape: f32[32,16], index: 1, kind: input, shape index: {}]
  %s2 = inlined_call_operand.vmem [shape: f32[16,256], index: 2, kind: input, shape index: {}]
  %s3 = inlined_call_operand.vmem [shape: f32[16,256], index: 3, kind: input, shape index: {}]
  %s4 = inlined_call_operand.hbm [shape: f32[64,256], index: 4, kind: output, shape index: {}]
  %s5 = sld [smem:[#allocation0]]
  $region26: #{tpu_custom_call.1} parent=0
    _
  %s7 = ssub.s32 1, %s5
  %s8 = scalar_select 0, %s7, %s5
  $region1: #{tpu_custom_call.1} parent=0
    #allocation2 [shape = 'u8[65536]{0}', space=vmem, size = 0x10000, scoped, tag = 'output window, operand 0, single buffered']
    #allocation3 [shape = 's32[1]{0}', space=sflag, size = 0x4, scoped, tag = 'scoped memory for tpu_custom_call.1']
    %9 = vsyncpa [#allocation3], 0
    // Predicated region
    $region2: #{tpu_custom_call.1} parent=1 // pred_check
      _
    $region3: #{tpu_custom_call.1} parent=1 // pred_check_branch
      %11 = sbr.rel (0) target = $region5
    $region4: #{tpu_custom_call.1} parent=1 // pred_region
      _
    $region5: #{tpu_custom_call.1} parent=1 // pred_fallthru
      _
    // Predicated region
    $region6: #{tpu_custom_call.1} parent=1 // pred_check
      _
    $region7: #{tpu_custom_call.1} parent=1 // pred_check_branch
      %13 = sbr.rel (0) target = $region9
    $region8: #{tpu_custom_call.1} parent=1 // pred_region
      _
    $region9: #{tpu_custom_call.1} parent=1 // pred_fallthru
      _
    // Predicated region
    $region10: #{tpu_custom_call.1} parent=1 // pred_check
      _
    $region11: #{tpu_custom_call.1} parent=1 // pred_check_branch
      %15 = sbr.rel (0) target = $region13
    $region12: #{tpu_custom_call.1} parent=1 // pred_region
      _
    $region13: #{tpu_custom_call.1} parent=1 // pred_fallthru
      _
    // Predicated region
    $region14: #{tpu_custom_call.1} parent=1 // pred_check
      _
    $region15: #{tpu_custom_call.1} parent=1 // pred_check_branch
      %17 = sbr.rel (0) target = $region17
    $region16: #{tpu_custom_call.1} parent=1 // pred_region
      _
    $region17: #{tpu_custom_call.1} parent=1 // pred_fallthru
      _
    %v18 = vld [vmem:[%s0] sm:$0xff]
    %v19 = vld [vmem:[%s0 + $0x8] sm:$0xff]
    %v20 = vld [vmem:[%s0 + $0x10] sm:$0xff]
    %v21 = vld [vmem:[%s0 + $0x18] sm:$0xff]
    %v22 = vld [vmem:[%s2] sm:$0xff]
    %v23 = vld [vmem:[%s2 + $0x8] sm:$0xff]
    %v24 = vld [vmem:[%s2 + $0x10] sm:$0xff]
    %v25 = vld [vmem:[%s2 + $0x18] sm:$0xff]
    %vm26 = vcmask 130048
    %v28 = vsel %vm26, %v18, 0
    %v31 = vsel %vm26, %v19, 0
    %v34 = vsel %vm26, %v20, 0
    %v37 = vsel %vm26, %v21, 0
    %39 = vmatprep.subr.mxu0 0.0
    %40 = vmatpush1.msra.mxu0 0.0
    %41 = vmatprep.subr.mxu0 0.0
    %42 = vmatpush1.msra.mxu0 0.0
    %43 = vmatprep.subr.mxu0 0.0
    %44 = vmatpush1.msra.mxu0 0.0
    %45 = vmatprep.subr.mxu0 0.0
    %46 = vmatpush1.msra.mxu0 0.0
    %47 = vmatprep.subr.mxu0 0.0
    %48 = vmatpush1.msra.mxu0 0.0
    %49 = vmatprep.subr.mxu0 0.0
    %50 = vmatpush1.msra.mxu0 0.0
    %51 = vmatprep.subr.mxu0 0.0
    %52 = vmatpush1.msra.mxu0 0.0
    %53 = vmatprep.subr.mxu0 0.0
    %54 = vmatpush1.msra.mxu0 0.0
    %55 = vmatprep.subr.mxu0 0.0
    %56 = vmatpush1.msra.mxu0 0.0
    %57 = vmatprep.subr.mxu0 0.0
    %58 = vmatpush1.msra.mxu0 0.0
    %59 = vmatprep.subr.mxu0 0.0
    %60 = vmatpush1.msra.mxu0 0.0
    %61 = vmatprep.subr.mxu0 0.0
    %62 = vmatpush1.msra.mxu0 0.0
    %63 = vmatprep.subr.mxu0 0.0
    %64 = vmatpush1.msra.mxu0 0.0
    %65 = vmatprep.subr.mxu0 0.0
    %66 = vmatpush1.msra.mxu0 0.0
    %v67 = vand.u32 %v25, 4294901760
    %68 = vmatprep.subr.mxu0 %v67
    %v69 = vand.u32 %v24, 4294901760
    %70 = vmatpush1.msra.mxu0 %v69
    %v71 = vand.u32 %v23, 4294901760
    %72 = vmatprep.subr.mxu0 %v71
    %v73 = vand.u32 %v22, 4294901760
    %74 = vmatpush1.msra.mxu0 %v73
    %75 = vmatprep.subr.mxu0 0.0
    %76 = vmatpush2.msra.mxu0 0.0
    %77 = vmatprep.subr.mxu0 0.0
    %78 = vmatpush2.msra.mxu0 0.0
    %79 = vmatprep.subr.mxu0 0.0
    %80 = vmatpush2.msra.mxu0 0.0
    %81 = vmatprep.subr.mxu0 0.0
    %82 = vmatpush2.msra.mxu0 0.0
    %83 = vmatprep.subr.mxu0 0.0
    %84 = vmatpush2.msra.mxu0 0.0
    %85 = vmatprep.subr.mxu0 0.0
    %86 = vmatpush2.msra.mxu0 0.0
    %87 = vmatprep.subr.mxu0 0.0
    %88 = vmatpush2.msra.mxu0 0.0
    %89 = vmatprep.subr.mxu0 0.0
    %90 = vmatpush2.msra.mxu0 0.0
    %91 = vmatprep.subr.mxu0 0.0
    %92 = vmatpush2.msra.mxu0 0.0
    %93 = vmatprep.subr.mxu0 0.0
    %94 = vmatpush2.msra.mxu0 0.0
    %95 = vmatprep.subr.mxu0 0.0
    %96 = vmatpush2.msra.mxu0 0.0
    %97 = vmatprep.subr.mxu0 0.0
    %98 = vmatpush2.msra.mxu0 0.0
    %99 = vmatprep.subr.mxu0 0.0
    %100 = vmatpush2.msra.mxu0 0.0
    %101 = vmatprep.subr.mxu0 0.0
    %102 = vmatpush2.msra.mxu0 0.0
    %103 = vmatprep.subr.mxu0 0.0
    %104 = vmatpush2.msra.mxu0 0.0
    %105 = vmatprep.subr.mxu0 0.0
    %106 = vmatpush2.msra.mxu0 0.0
    %107 = vmatprep.mubr.f32.mxu0 0.0
    %v108 = vand.u32 %v28, 4294901760
    %v109 = vsub.f32 %v28, %v108
    %v110 = vand.u32 %v109, 4294901760
    %v111 = vsub.f32 %v109, %v110
    %v112 = vand.u32 %v111, 4294901760
    %113 = vmatmul.mubr.f32.gmra.mxu0 %v112
    %v114 = vpop.f32.mrf.mxu0
    %v115 = vadd.f32 0.0, %v114
    %v116 = vpop.f32.mrf.mxu0
    %v117 = vadd.f32 0.0, %v116
    %118 = vmatprep.mubr.f32.mxu0 0.0
    %v119 = vand.u32 %v31, 4294901760
    %v120 = vsub.f32 %v31, %v119
    %v121 = vand.u32 %v120, 4294901760
    %v122 = vsub.f32 %v120, %v121
    %v123 = vand.u32 %v122, 4294901760
    %124 = vmatmul.mubr.f32.gmra.mxu0 %v123
    %v125 = vpop.f32.mrf.mxu0
    %v126 = vadd.f32 0.0, %v125
    %v127 = vpop.f32.mrf.mxu0
    %v128 = vadd.f32 0.0, %v127
    %129 = vmatprep.mubr.f32.mxu0 0.0
    %v130 = vand.u32 %v34, 4294901760
    %v131 = vsub.f32 %v34, %v130
    %v132 = vand.u32 %v131, 4294901760
    %v133 = vsub.f32 %v131, %v132
    %v134 = vand.u32 %v133, 4294901760
    %135 = vmatmul.mubr.f32.gmra.mxu0 %v134
    %v136 = vpop.f32.mrf.mxu0
    %v137 = vadd.f32 0.0, %v136
    %v138 = vpop.f32.mrf.mxu0
    %v139 = vadd.f32 0.0, %v138
    %140 = vmatprep.mubr.f32.mxu0 0.0
    %v141 = vand.u32 %v37, 4294901760
    %v142 = vsub.f32 %v37, %v141
    %v143 = vand.u32 %v142, 4294901760
    %v144 = vsub.f32 %v142, %v143
    %v145 = vand.u32 %v144, 4294901760
    %146 = vmatmul.mubr.f32.gmra.mxu0 %v145
    %v147 = vpop.f32.mrf.mxu0
    %v148 = vadd.f32 0.0, %v147
    %v149 = vpop.f32.mrf.mxu0
    %v150 = vadd.f32 0.0, %v149
    %151 = vdwg.mxu0
    %152 = vmatprep.subr.mxu0 0.0
    %153 = vmatpush1.msra.mxu0 0.0
    %154 = vmatprep.subr.mxu0 0.0
    %155 = vmatpush1.msra.mxu0 0.0
    %156 = vmatprep.subr.mxu0 0.0
    %157 = vmatpush1.msra.mxu0 0.0
    %158 = vmatprep.subr.mxu0 0.0
    %159 = vmatpush1.msra.mxu0 0.0
    %160 = vmatprep.subr.mxu0 0.0
    %161 = vmatpush1.msra.mxu0 0.0
    %162 = vmatprep.subr.mxu0 0.0
    %163 = vmatpush1.msra.mxu0 0.0
    %164 = vmatprep.subr.mxu0 0.0
    %165 = vmatpush1.msra.mxu0 0.0
    %166 = vmatprep.subr.mxu0 0.0
    %167 = vmatpush1.msra.mxu0 0.0
    %168 = vmatprep.subr.mxu0 0.0
    %169 = vmatpush1.msra.mxu0 0.0
    %170 = vmatprep.subr.mxu0 0.0
    %171 = vmatpush1.msra.mxu0 0.0
    %172 = vmatprep.subr.mxu0 0.0
    %173 = vmatpush1.msra.mxu0 0.0
    %174 = vmatprep.subr.mxu0 0.0
    %175 = vmatpush1.msra.mxu0 0.0
    %176 = vmatprep.subr.mxu0 0.0
    %177 = vmatpush1.msra.mxu0 0.0
    %178 = vmatprep.subr.mxu0 0.0
    %179 = vmatpush1.msra.mxu0 0.0
    %v180 = vand.u32 %v25, 4294901760
    %v181 = vsub.f32 %v25, %v180
    %v182 = vand.u32 %v181, 4294901760
    %v183 = vsub.f32 %v181, %v182
    %v184 = vand.u32 %v183, 4294901760
    %185 = vmatprep.subr.mxu0 %v184
    %v186 = vand.u32 %v24, 4294901760
    %v187 = vsub.f32 %v24, %v186
    %v188 = vand.u32 %v187, 4294901760
    %v189 = vsub.f32 %v187, %v188
    %v190 = vand.u32 %v189, 4294901760
    %191 = vmatpush1.msra.mxu0 %v190
    %v192 = vand.u32 %v23, 4294901760
    %v193 = vsub.f32 %v23, %v192
    %v194 = vand.u32 %v193, 4294901760
    %v195 = vsub.f32 %v193, %v194
    %v196 = vand.u32 %v195, 4294901760
    %197 = vmatprep.subr.mxu0 %v196
    %v198 = vand.u32 %v22, 4294901760
    %v199 = vsub.f32 %v22, %v198
    %v200 = vand.u32 %v199, 4294901760
    %v201 = vsub.f32 %v199, %v200
    %v202 = vand.u32 %v201, 4294901760
    %203 = vmatpush1.msra.mxu0 %v202
    %204 = vmatprep.subr.mxu0 0.0
    %205 = vmatpush2.msra.mxu0 0.0
    %206 = vmatprep.subr.mxu0 0.0
    %207 = vmatpush2.msra.mxu0 0.0
    %208 = vmatprep.subr.mxu0 0.0
    %209 = vmatpush2.msra.mxu0 0.0
    %210 = vmatprep.subr.mxu0 0.0
    %211 = vmatpush2.msra.mxu0 0.0
    %212 = vmatprep.subr.mxu0 0.0
    %213 = vmatpush2.msra.mxu0 0.0
    %214 = vmatprep.subr.mxu0 0.0
    %215 = vmatpush2.msra.mxu0 0.0
    %216 = vmatprep.subr.mxu0 0.0
    %217 = vmatpush2.msra.mxu0 0.0
    %218 = vmatprep.subr.mxu0 0.0
    %219 = vmatpush2.msra.mxu0 0.0
    %220 = vmatprep.subr.mxu0 0.0
    %221 = vmatpush2.msra.mxu0 0.0
    %222 = vmatprep.subr.mxu0 0.0
    %223 = vmatpush2.msra.mxu0 0.0
    %224 = vmatprep.subr.mxu0 0.0
    %225 = vmatpush2.msra.mxu0 0.0
    %226 = vmatprep.subr.mxu0 0.0
    %227 = vmatpush2.msra.mxu0 0.0
    %228 = vmatprep.subr.mxu0 0.0
    %229 = vmatpush2.msra.mxu0 0.0
    %230 = vmatprep.subr.mxu0 0.0
    %231 = vmatpush2.msra.mxu0 0.0
    %232 = vmatprep.subr.mxu0 0.0
    %233 = vmatpush2.msra.mxu0 0.0
    %234 = vmatprep.subr.mxu0 0.0
    %235 = vmatpush2.msra.mxu0 0.0
    %236 = vmatprep.mubr.f32.mxu0 0.0
    %v237 = vand.u32 %v28, 4294901760
    %238 = vmatmul.mubr.f32.gmra.mxu0 %v237
    %v239 = vpop.f32.mrf.mxu0
    %v240 = vadd.f32 %v115, %v239
    %v241 = vpop.f32.mrf.mxu0
    %v242 = vadd.f32 %v117, %v241
    %243 = vmatprep.mubr.f32.mxu0 0.0
    %v244 = vand.u32 %v31, 4294901760
    %245 = vmatmul.mubr.f32.gmra.mxu0 %v244
    %v246 = vpop.f32.mrf.mxu0
    %v247 = vadd.f32 %v126, %v246
    %v248 = vpop.f32.mrf.mxu0
    %v249 = vadd.f32 %v128, %v248
    %250 = vmatprep.mubr.f32.mxu0 0.0
    %v251 = vand.u32 %v34, 4294901760
    %252 = vmatmul.mubr.f32.gmra.mxu0 %v251
    %v253 = vpop.f32.mrf.mxu0
    %v254 = vadd.f32 %v137, %v253
    %v255 = vpop.f32.mrf.mxu0
    %v256 = vadd.f32 %v139, %v255
    %257 = vmatprep.mubr.f32.mxu0 0.0
    %v258 = vand.u32 %v37, 4294901760
    %259 = vmatmul.mubr.f32.gmra.mxu0 %v258
    %v260 = vpop.f32.mrf.mxu0
    %v261 = vadd.f32 %v148, %v260
    %v262 = vpop.f32.mrf.mxu0
    %v263 = vadd.f32 %v150, %v262
    %264 = vdwg.mxu0
    %265 = vmatprep.subr.mxu0 0.0
    %266 = vmatpush1.msra.mxu0 0.0
    %267 = vmatprep.subr.mxu0 0.0
    %268 = vmatpush1.msra.mxu0 0.0
    %269 = vmatprep.subr.mxu0 0.0
    %270 = vmatpush1.msra.mxu0 0.0
    %271 = vmatprep.subr.mxu0 0.0
    %272 = vmatpush1.msra.mxu0 0.0
    %273 = vmatprep.subr.mxu0 0.0
    %274 = vmatpush1.msra.mxu0 0.0
    %275 = vmatprep.subr.mxu0 0.0
    %276 = vmatpush1.msra.mxu0 0.0
    %277 = vmatprep.subr.mxu0 0.0
    %278 = vmatpush1.msra.mxu0 0.0
    %279 = vmatprep.subr.mxu0 0.0
    %280 = vmatpush1.msra.mxu0 0.0
    %281 = vmatprep.subr.mxu0 0.0
    %282 = vmatpush1.msra.mxu0 0.0
    %283 = vmatprep.subr.mxu0 0.0
    %284 = vmatpush1.msra.mxu0 0.0
    %285 = vmatprep.subr.mxu0 0.0
    %286 = vmatpush1.msra.mxu0 0.0
    %287 = vmatprep.subr.mxu0 0.0
    %288 = vmatpush1.msra.mxu0 0.0
    %289 = vmatprep.subr.mxu0 0.0
    %290 = vmatpush1.msra.mxu0 0.0
    %291 = vmatprep.subr.mxu0 0.0
    %292 = vmatpush1.msra.mxu0 0.0
    %v293 = vand.u32 %v25, 4294901760
    %v294 = vsub.f32 %v25, %v293
    %295 = vmatprep.subr.mxu0 %v294
    %v296 = vand.u32 %v24, 4294901760
    %v297 = vsub.f32 %v24, %v296
    %298 = vmatpush1.msra.mxu0 %v297
    %v299 = vand.u32 %v23, 4294901760
    %v300 = vsub.f32 %v23, %v299
    %301 = vmatprep.subr.mxu0 %v300
    %v302 = vand.u32 %v22, 4294901760
    %v303 = vsub.f32 %v22, %v302
    %304 = vmatpush1.msra.mxu0 %v303
    %305 = vmatprep.subr.mxu0 0.0
    %306 = vmatpush2.msra.mxu0 0.0
    %307 = vmatprep.subr.mxu0 0.0
    %308 = vmatpush2.msra.mxu0 0.0
    %309 = vmatprep.subr.mxu0 0.0
    %310 = vmatpush2.msra.mxu0 0.0
    %311 = vmatprep.subr.mxu0 0.0
    %312 = vmatpush2.msra.mxu0 0.0
    %313 = vmatprep.subr.mxu0 0.0
    %314 = vmatpush2.msra.mxu0 0.0
    %315 = vmatprep.subr.mxu0 0.0
    %316 = vmatpush2.msra.mxu0 0.0
    %317 = vmatprep.subr.mxu0 0.0
    %318 = vmatpush2.msra.mxu0 0.0
    %319 = vmatprep.subr.mxu0 0.0
    %320 = vmatpush2.msra.mxu0 0.0
    %321 = vmatprep.subr.mxu0 0.0
    %322 = vmatpush2.msra.mxu0 0.0
    %323 = vmatprep.subr.mxu0 0.0
    %324 = vmatpush2.msra.mxu0 0.0
    %325 = vmatprep.subr.mxu0 0.0
    %326 = vmatpush2.msra.mxu0 0.0
    %327 = vmatprep.subr.mxu0 0.0
    %328 = vmatpush2.msra.mxu0 0.0
    %329 = vmatprep.subr.mxu0 0.0
    %330 = vmatpush2.msra.mxu0 0.0
    %331 = vmatprep.subr.mxu0 0.0
    %332 = vmatpush2.msra.mxu0 0.0
    %333 = vmatprep.subr.mxu0 0.0
    %334 = vmatpush2.msra.mxu0 0.0
    %335 = vmatprep.subr.mxu0 0.0
    %336 = vmatpush2.msra.mxu0 0.0
    %337 = vmatprep.mubr.f32.mxu0 0.0
    %v338 = vand.u32 %v28, 4294901760
    %v339 = vsub.f32 %v28, %v338
    %340 = vmatmul.mubr.f32.gmra.mxu0 %v339
    %v341 = vpop.f32.mrf.mxu0
    %v342 = vadd.f32 %v240, %v341
    %v343 = vpop.f32.mrf.mxu0
    %v344 = vadd.f32 %v242, %v343
    %345 = vmatprep.mubr.f32.mxu0 0.0
    %v346 = vand.u32 %v31, 4294901760
    %v347 = vsub.f32 %v31, %v346
    %348 = vmatmul.mubr.f32.gmra.mxu0 %v347
    %v349 = vpop.f32.mrf.mxu0
    %v350 = vadd.f32 %v247, %v349
    %v351 = vpop.f32.mrf.mxu0
    %v352 = vadd.f32 %v249, %v351
    %353 = vmatprep.mubr.f32.mxu0 0.0
    %v354 = vand.u32 %v34, 4294901760
    %v355 = vsub.f32 %v34, %v354
    %356 = vmatmul.mubr.f32.gmra.mxu0 %v355
    %v357 = vpop.f32.mrf.mxu0
    %v358 = vadd.f32 %v254, %v357
    %v359 = vpop.f32.mrf.mxu0
    %v360 = vadd.f32 %v256, %v359
    %361 = vmatprep.mubr.f32.mxu0 0.0
    %v362 = vand.u32 %v37, 4294901760
    %v363 = vsub.f32 %v37, %v362
    %364 = vmatmul.mubr.f32.gmra.mxu0 %v363
    %v365 = vpop.f32.mrf.mxu0
    %v366 = vadd.f32 %v261, %v365
    %v367 = vpop.f32.mrf.mxu0
    %v368 = vadd.f32 %v263, %v367
    %369 = vdwg.mxu0
    %370 = vmatprep.subr.mxu0 0.0
    %371 = vmatpush1.msra.mxu0 0.0
    %372 = vmatprep.subr.mxu0 0.0
    %373 = vmatpush1.msra.mxu0 0.0
    %374 = vmatprep.subr.mxu0 0.0
    %375 = vmatpush1.msra.mxu0 0.0
    %376 = vmatprep.subr.mxu0 0.0
    %377 = vmatpush1.msra.mxu0 0.0
    %378 = vmatprep.subr.mxu0 0.0
    %379 = vmatpush1.msra.mxu0 0.0
    %380 = vmatprep.subr.mxu0 0.0
    %381 = vmatpush1.msra.mxu0 0.0
    %382 = vmatprep.subr.mxu0 0.0
    %383 = vmatpush1.msra.mxu0 0.0
    %384 = vmatprep.subr.mxu0 0.0
    %385 = vmatpush1.msra.mxu0 0.0
    %386 = vmatprep.subr.mxu0 0.0
    %387 = vmatpush1.msra.mxu0 0.0
    %388 = vmatprep.subr.mxu0 0.0
    %389 = vmatpush1.msra.mxu0 0.0
    %390 = vmatprep.subr.mxu0 0.0
    %391 = vmatpush1.msra.mxu0 0.0
    %392 = vmatprep.subr.mxu0 0.0
    %393 = vmatpush1.msra.mxu0 0.0
    %394 = vmatprep.subr.mxu0 0.0
    %395 = vmatpush1.msra.mxu0 0.0
    %396 = vmatprep.subr.mxu0 0.0
    %397 = vmatpush1.msra.mxu0 0.0
    %v398 = vand.u32 %v25, 4294901760
    %399 = vmatprep.subr.mxu0 %v398
    %v400 = vand.u32 %v24, 4294901760
    %401 = vmatpush1.msra.mxu0 %v400
    %v402 = vand.u32 %v23, 4294901760
    %403 = vmatprep.subr.mxu0 %v402
    %v404 = vand.u32 %v22, 4294901760
    %405 = vmatpush1.msra.mxu0 %v404
    %406 = vmatprep.subr.mxu0 0.0
    %407 = vmatpush2.msra.mxu0 0.0
    %408 = vmatprep.subr.mxu0 0.0
    %409 = vmatpush2.msra.mxu0 0.0
    %410 = vmatprep.subr.mxu0 0.0
    %411 = vmatpush2.msra.mxu0 0.0
    %412 = vmatprep.subr.mxu0 0.0
    %413 = vmatpush2.msra.mxu0 0.0
    %414 = vmatprep.subr.mxu0 0.0
    %415 = vmatpush2.msra.mxu0 0.0
    %416 = vmatprep.subr.mxu0 0.0
    %417 = vmatpush2.msra.mxu0 0.0
    %418 = vmatprep.subr.mxu0 0.0
    %419 = vmatpush2.msra.mxu0 0.0
    %420 = vmatprep.subr.mxu0 0.0
    %421 = vmatpush2.msra.mxu0 0.0
    %422 = vmatprep.subr.mxu0 0.0
    %423 = vmatpush2.msra.mxu0 0.0
    %424 = vmatprep.subr.mxu0 0.0
    %425 = vmatpush2.msra.mxu0 0.0
    %426 = vmatprep.subr.mxu0 0.0
    %427 = vmatpush2.msra.mxu0 0.0
    %428 = vmatprep.subr.mxu0 0.0
    %429 = vmatpush2.msra.mxu0 0.0
    %430 = vmatprep.subr.mxu0 0.0
    %431 = vmatpush2.msra.mxu0 0.0
    %432 = vmatprep.subr.mxu0 0.0
    %433 = vmatpush2.msra.mxu0 0.0
    %434 = vmatprep.subr.mxu0 0.0
    %435 = vmatpush2.msra.mxu0 0.0
    %436 = vmatprep.subr.mxu0 0.0
    %437 = vmatpush2.msra.mxu0 0.0
    %438 = vmatprep.mubr.f32.mxu0 0.0
    %v439 = vand.u32 %v28, 4294901760
    %v440 = vsub.f32 %v28, %v439
    %v441 = vand.u32 %v440, 4294901760
    %442 = vmatmul.mubr.f32.gmra.mxu0 %v441
    %v443 = vpop.f32.mrf.mxu0
    %v444 = vadd.f32 %v342, %v443
    %v445 = vpop.f32.mrf.mxu0
    %v446 = vadd.f32 %v344, %v445
    %447 = vmatprep.mubr.f32.mxu0 0.0
    %v448 = vand.u32 %v31, 4294901760
    %v449 = vsub.f32 %v31, %v448
    %v450 = vand.u32 %v449, 4294901760
    %451 = vmatmul.mubr.f32.gmra.mxu0 %v450
    %v452 = vpop.f32.mrf.mxu0
    %v453 = vadd.f32 %v350, %v452
    %v454 = vpop.f32.mrf.mxu0
    %v455 = vadd.f32 %v352, %v454
    %456 = vmatprep.mubr.f32.mxu0 0.0
    %v457 = vand.u32 %v34, 4294901760
    %v458 = vsub.f32 %v34, %v457
    %v459 = vand.u32 %v458, 4294901760
    %460 = vmatmul.mubr.f32.gmra.mxu0 %v459
    %v461 = vpop.f32.mrf.mxu0
    %v462 = vadd.f32 %v358, %v461
    %v463 = vpop.f32.mrf.mxu0
    %v464 = vadd.f32 %v360, %v463
    %465 = vmatprep.mubr.f32.mxu0 0.0
    %v466 = vand.u32 %v37, 4294901760
    %v467 = vsub.f32 %v37, %v466
    %v468 = vand.u32 %v467, 4294901760
    %469 = vmatmul.mubr.f32.gmra.mxu0 %v468
    %v470 = vpop.f32.mrf.mxu0
    %v471 = vadd.f32 %v366, %v470
    %v472 = vpop.f32.mrf.mxu0
    %v473 = vadd.f32 %v368, %v472
    %474 = vdwg.mxu0
    %475 = vmatprep.subr.mxu0 0.0
    %476 = vmatpush1.msra.mxu0 0.0
    %477 = vmatprep.subr.mxu0 0.0
    %478 = vmatpush1.msra.mxu0 0.0
    %479 = vmatprep.subr.mxu0 0.0
    %480 = vmatpush1.msra.mxu0 0.0
    %481 = vmatprep.subr.mxu0 0.0
    %482 = vmatpush1.msra.mxu0 0.0
    %483 = vmatprep.subr.mxu0 0.0
    %484 = vmatpush1.msra.mxu0 0.0
    %485 = vmatprep.subr.mxu0 0.0
    %486 = vmatpush1.msra.mxu0 0.0
    %487 = vmatprep.subr.mxu0 0.0
    %488 = vmatpush1.msra.mxu0 0.0
    %489 = vmatprep.subr.mxu0 0.0
    %490 = vmatpush1.msra.mxu0 0.0
    %491 = vmatprep.subr.mxu0 0.0
    %492 = vmatpush1.msra.mxu0 0.0
    %493 = vmatprep.subr.mxu0 0.0
    %494 = vmatpush1.msra.mxu0 0.0
    %495 = vmatprep.subr.mxu0 0.0
    %496 = vmatpush1.msra.mxu0 0.0
    %497 = vmatprep.subr.mxu0 0.0
    %498 = vmatpush1.msra.mxu0 0.0
    %499 = vmatprep.subr.mxu0 0.0
    %500 = vmatpush1.msra.mxu0 0.0
    %501 = vmatprep.subr.mxu0 0.0
    %502 = vmatpush1.msra.mxu0 0.0
    %v503 = vand.u32 %v25, 4294901760
    %v504 = vsub.f32 %v25, %v503
    %v505 = vand.u32 %v504, 4294901760
    %506 = vmatprep.subr.mxu0 %v505
    %v507 = vand.u32 %v24, 4294901760
    %v508 = vsub.f32 %v24, %v507
    %v509 = vand.u32 %v508, 4294901760
    %510 = vmatpush1.msra.mxu0 %v509
    %v511 = vand.u32 %v23, 4294901760
    %v512 = vsub.f32 %v23, %v511
    %v513 = vand.u32 %v512, 4294901760
    %514 = vmatprep.subr.mxu0 %v513
    %v515 = vand.u32 %v22, 4294901760
    %v516 = vsub.f32 %v22, %v515
    %v517 = vand.u32 %v516, 4294901760
    %518 = vmatpush1.msra.mxu0 %v517
    %519 = vmatprep.subr.mxu0 0.0
    %520 = vmatpush2.msra.mxu0 0.0
    %521 = vmatprep.subr.mxu0 0.0
    %522 = vmatpush2.msra.mxu0 0.0
    %523 = vmatprep.subr.mxu0 0.0
    %524 = vmatpush2.msra.mxu0 0.0
    %525 = vmatprep.subr.mxu0 0.0
    %526 = vmatpush2.msra.mxu0 0.0
    %527 = vmatprep.subr.mxu0 0.0
    %528 = vmatpush2.msra.mxu0 0.0
    %529 = vmatprep.subr.mxu0 0.0
    %530 = vmatpush2.msra.mxu0 0.0
    %531 = vmatprep.subr.mxu0 0.0
    %532 = vmatpush2.msra.mxu0 0.0
    %533 = vmatprep.subr.mxu0 0.0
    %534 = vmatpush2.msra.mxu0 0.0
    %535 = vmatprep.subr.mxu0 0.0
    %536 = vmatpush2.msra.mxu0 0.0
    %537 = vmatprep.subr.mxu0 0.0
    %538 = vmatpush2.msra.mxu0 0.0
    %539 = vmatprep.subr.mxu0 0.0
    %540 = vmatpush2.msra.mxu0 0.0
    %541 = vmatprep.subr.mxu0 0.0
    %542 = vmatpush2.msra.mxu0 0.0
    %543 = vmatprep.subr.mxu0 0.0
    %544 = vmatpush2.msra.mxu0 0.0
    %545 = vmatprep.subr.mxu0 0.0
    %546 = vmatpush2.msra.mxu0 0.0
    %547 = vmatprep.subr.mxu0 0.0
    %548 = vmatpush2.msra.mxu0 0.0
    %549 = vmatprep.subr.mxu0 0.0
    %550 = vmatpush2.msra.mxu0 0.0
    %551 = vmatprep.mubr.f32.mxu0 0.0
    %v552 = vand.u32 %v28, 4294901760
    %553 = vmatmul.mubr.f32.gmra.mxu0 %v552
    %v554 = vpop.f32.mrf.mxu0
    %v555 = vadd.f32 %v444, %v554
    %v556 = vpop.f32.mrf.mxu0
    %v557 = vadd.f32 %v446, %v556
    %558 = vmatprep.mubr.f32.mxu0 0.0
    %v559 = vand.u32 %v31, 4294901760
    %560 = vmatmul.mubr.f32.gmra.mxu0 %v559
    %v561 = vpop.f32.mrf.mxu0
    %v562 = vadd.f32 %v453, %v561
    %v563 = vpop.f32.mrf.mxu0
    %v564 = vadd.f32 %v455, %v563
    %565 = vmatprep.mubr.f32.mxu0 0.0
    %v566 = vand.u32 %v34, 4294901760
    %567 = vmatmul.mubr.f32.gmra.mxu0 %v566
    %v568 = vpop.f32.mrf.mxu0
    %v569 = vadd.f32 %v462, %v568
    %v570 = vpop.f32.mrf.mxu0
    %v571 = vadd.f32 %v464, %v570
    %572 = vmatprep.mubr.f32.mxu0 0.0
    %v573 = vand.u32 %v37, 4294901760
    %574 = vmatmul.mubr.f32.gmra.mxu0 %v573
    %v575 = vpop.f32.mrf.mxu0
    %v576 = vadd.f32 %v471, %v575
    %v577 = vpop.f32.mrf.mxu0
    %v578 = vadd.f32 %v473, %v577
    %579 = vdwg.mxu0
    %580 = vmatprep.subr.mxu0 0.0
    %581 = vmatpush1.msra.mxu0 0.0
    %582 = vmatprep.subr.mxu0 0.0
    %583 = vmatpush1.msra.mxu0 0.0
    %584 = vmatprep.subr.mxu0 0.0
    %585 = vmatpush1.msra.mxu0 0.0
    %586 = vmatprep.subr.mxu0 0.0
    %587 = vmatpush1.msra.mxu0 0.0
    %588 = vmatprep.subr.mxu0 0.0
    %589 = vmatpush1.msra.mxu0 0.0
    %590 = vmatprep.subr.mxu0 0.0
    %591 = vmatpush1.msra.mxu0 0.0
    %592 = vmatprep.subr.mxu0 0.0
    %593 = vmatpush1.msra.mxu0 0.0
    %594 = vmatprep.subr.mxu0 0.0
    %595 = vmatpush1.msra.mxu0 0.0
    %596 = vmatprep.subr.mxu0 0.0
    %597 = vmatpush1.msra.mxu0 0.0
    %598 = vmatprep.subr.mxu0 0.0
    %599 = vmatpush1.msra.mxu0 0.0
    %600 = vmatprep.subr.mxu0 0.0
    %601 = vmatpush1.msra.mxu0 0.0
    %602 = vmatprep.subr.mxu0 0.0
    %603 = vmatpush1.msra.mxu0 0.0
    %604 = vmatprep.subr.mxu0 0.0
    %605 = vmatpush1.msra.mxu0 0.0
    %606 = vmatprep.subr.mxu0 0.0
    %607 = vmatpush1.msra.mxu0 0.0
    %v608 = vand.u32 %v25, 4294901760
    %609 = vmatprep.subr.mxu0 %v608
    %v610 = vand.u32 %v24, 4294901760
    %611 = vmatpush1.msra.mxu0 %v610
    %v612 = vand.u32 %v23, 4294901760
    %613 = vmatprep.subr.mxu0 %v612
    %v614 = vand.u32 %v22, 4294901760
    %615 = vmatpush1.msra.mxu0 %v614
    %616 = vmatprep.subr.mxu0 0.0
    %617 = vmatpush2.msra.mxu0 0.0
    %618 = vmatprep.subr.mxu0 0.0
    %619 = vmatpush2.msra.mxu0 0.0
    %620 = vmatprep.subr.mxu0 0.0
    %621 = vmatpush2.msra.mxu0 0.0
    %622 = vmatprep.subr.mxu0 0.0
    %623 = vmatpush2.msra.mxu0 0.0
    %624 = vmatprep.subr.mxu0 0.0
    %625 = vmatpush2.msra.mxu0 0.0
    %626 = vmatprep.subr.mxu0 0.0
    %627 = vmatpush2.msra.mxu0 0.0
    %628 = vmatprep.subr.mxu0 0.0
    %629 = vmatpush2.msra.mxu0 0.0
    %630 = vmatprep.subr.mxu0 0.0
    %631 = vmatpush2.msra.mxu0 0.0
    %632 = vmatprep.subr.mxu0 0.0
    %633 = vmatpush2.msra.mxu0 0.0
    %634 = vmatprep.subr.mxu0 0.0
    %635 = vmatpush2.msra.mxu0 0.0
    %636 = vmatprep.subr.mxu0 0.0
    %637 = vmatpush2.msra.mxu0 0.0
    %638 = vmatprep.subr.mxu0 0.0
    %639 = vmatpush2.msra.mxu0 0.0
    %640 = vmatprep.subr.mxu0 0.0
    %641 = vmatpush2.msra.mxu0 0.0
    %642 = vmatprep.subr.mxu0 0.0
    %643 = vmatpush2.msra.mxu0 0.0
    %644 = vmatprep.subr.mxu0 0.0
    %645 = vmatpush2.msra.mxu0 0.0
    %646 = vmatprep.subr.mxu0 0.0
    %647 = vmatpush2.msra.mxu0 0.0
    %648 = vmatprep.mubr.f32.mxu0 0.0
    %v649 = vand.u32 %v28, 4294901760
    %650 = vmatmul.mubr.f32.gmra.mxu0 %v649
    %v651 = vpop.f32.mrf.mxu0
    %v652 = vadd.f32 %v555, %v651
    %v653 = vpop.f32.mrf.mxu0
    %v654 = vadd.f32 %v557, %v653
    %655 = vmatprep.mubr.f32.mxu0 0.0
    %v656 = vand.u32 %v31, 4294901760
    %657 = vmatmul.mubr.f32.gmra.mxu0 %v656
    %v658 = vpop.f32.mrf.mxu0
    %v659 = vadd.f32 %v562, %v658
    %v660 = vpop.f32.mrf.mxu0
    %v661 = vadd.f32 %v564, %v660
    %662 = vmatprep.mubr.f32.mxu0 0.0
    %v663 = vand.u32 %v34, 4294901760
    %664 = vmatmul.mubr.f32.gmra.mxu0 %v663
    %v665 = vpop.f32.mrf.mxu0
    %v666 = vadd.f32 %v569, %v665
    %v667 = vpop.f32.mrf.mxu0
    %v668 = vadd.f32 %v571, %v667
    %669 = vmatprep.mubr.f32.mxu0 0.0
    %v670 = vand.u32 %v37, 4294901760
    %671 = vmatmul.mubr.f32.gmra.mxu0 %v670
    %v672 = vpop.f32.mrf.mxu0
    %v673 = vadd.f32 %v576, %v672
    %v674 = vpop.f32.mrf.mxu0
    %v675 = vadd.f32 %v578, %v674
    %676 = vdwg.mxu0
    %v677 = vld [vmem:[%s1] sm:$0xff]
    %v678 = vld [vmem:[%s1 + $0x8] sm:$0xff]
    %v679 = vld [vmem:[%s1 + $0x10] sm:$0xff]
    %v680 = vld [vmem:[%s1 + $0x18] sm:$0xff]
    %v681 = vld [vmem:[%s3] sm:$0xff]
    %v682 = vld [vmem:[%s3 + $0x8] sm:$0xff]
    %v683 = vld [vmem:[%s3 + $0x10] sm:$0xff]
    %v684 = vld [vmem:[%s3 + $0x18] sm:$0xff]
    %v686 = vsel %vm26, %v677, 0
    %v689 = vsel %vm26, %v678, 0
    %v692 = vsel %vm26, %v679, 0
    %v695 = vsel %vm26, %v680, 0
    %697 = vmatprep.subr.mxu0 0.0
    %698 = vmatpush1.msra.mxu0 0.0
    %699 = vmatprep.subr.mxu0 0.0
    %700 = vmatpush1.msra.mxu0 0.0
    %701 = vmatprep.subr.mxu0 0.0
    %702 = vmatpush1.msra.mxu0 0.0
    %703 = vmatprep.subr.mxu0 0.0
    %704 = vmatpush1.msra.mxu0 0.0
    %705 = vmatprep.subr.mxu0 0.0
    %706 = vmatpush1.msra.mxu0 0.0
    %707 = vmatprep.subr.mxu0 0.0
    %708 = vmatpush1.msra.mxu0 0.0
    %709 = vmatprep.subr.mxu0 0.0
    %710 = vmatpush1.msra.mxu0 0.0
    %711 = vmatprep.subr.mxu0 0.0
    %712 = vmatpush1.msra.mxu0 0.0
    %713 = vmatprep.subr.mxu0 0.0
    %714 = vmatpush1.msra.mxu0 0.0
    %715 = vmatprep.subr.mxu0 0.0
    %716 = vmatpush1.msra.mxu0 0.0
    %717 = vmatprep.subr.mxu0 0.0
    %718 = vmatpush1.msra.mxu0 0.0
    %719 = vmatprep.subr.mxu0 0.0
    %720 = vmatpush1.msra.mxu0 0.0
    %721 = vmatprep.subr.mxu0 0.0
    %722 = vmatpush1.msra.mxu0 0.0
    %723 = vmatprep.subr.mxu0 0.0
    %724 = vmatpush1.msra.mxu0 0.0
    %v725 = vand.u32 %v684, 4294901760
    %726 = vmatprep.subr.mxu0 %v725
    %v727 = vand.u32 %v683, 4294901760
    %728 = vmatpush1.msra.mxu0 %v727
    %v729 = vand.u32 %v682, 4294901760
    %730 = vmatprep.subr.mxu0 %v729
    %v731 = vand.u32 %v681, 4294901760
    %732 = vmatpush1.msra.mxu0 %v731
    %733 = vmatprep.subr.mxu0 0.0
    %734 = vmatpush2.msra.mxu0 0.0
    %735 = vmatprep.subr.mxu0 0.0
    %736 = vmatpush2.msra.mxu0 0.0
    %737 = vmatprep.subr.mxu0 0.0
    %738 = vmatpush2.msra.mxu0 0.0
    %739 = vmatprep.subr.mxu0 0.0
    %740 = vmatpush2.msra.mxu0 0.0
    %741 = vmatprep.subr.mxu0 0.0
    %742 = vmatpush2.msra.mxu0 0.0
    %743 = vmatprep.subr.mxu0 0.0
    %744 = vmatpush2.msra.mxu0 0.0
    %745 = vmatprep.subr.mxu0 0.0
    %746 = vmatpush2.msra.mxu0 0.0
    %747 = vmatprep.subr.mxu0 0.0
    %748 = vmatpush2.msra.mxu0 0.0
    %749 = vmatprep.subr.mxu0 0.0
    %750 = vmatpush2.msra.mxu0 0.0
    %751 = vmatprep.subr.mxu0 0.0
    %752 = vmatpush2.msra.mxu0 0.0
    %753 = vmatprep.subr.mxu0 0.0
    %754 = vmatpush2.msra.mxu0 0.0
    %755 = vmatprep.subr.mxu0 0.0
    %756 = vmatpush2.msra.mxu0 0.0
    %757 = vmatprep.subr.mxu0 0.0
    %758 = vmatpush2.msra.mxu0 0.0
    %759 = vmatprep.subr.mxu0 0.0
    %760 = vmatpush2.msra.mxu0 0.0
    %761 = vmatprep.subr.mxu0 0.0
    %762 = vmatpush2.msra.mxu0 0.0
    %763 = vmatprep.subr.mxu0 0.0
    %764 = vmatpush2.msra.mxu0 0.0
    %765 = vmatprep.mubr.f32.mxu0 0.0
    %v766 = vand.u32 %v686, 4294901760
    %v767 = vsub.f32 %v686, %v766
    %v768 = vand.u32 %v767, 4294901760
    %v769 = vsub.f32 %v767, %v768
    %v770 = vand.u32 %v769, 4294901760
    %771 = vmatmul.mubr.f32.gmra.mxu0 %v770
    %v772 = vpop.f32.mrf.mxu0
    %v773 = vadd.f32 0.0, %v772
    %v774 = vpop.f32.mrf.mxu0
    %v775 = vadd.f32 0.0, %v774
    %776 = vmatprep.mubr.f32.mxu0 0.0
    %v777 = vand.u32 %v689, 4294901760
    %v778 = vsub.f32 %v689, %v777
    %v779 = vand.u32 %v778, 4294901760
    %v780 = vsub.f32 %v778, %v779
    %v781 = vand.u32 %v780, 4294901760
    %782 = vmatmul.mubr.f32.gmra.mxu0 %v781
    %v783 = vpop.f32.mrf.mxu0
    %v784 = vadd.f32 0.0, %v783
    %v785 = vpop.f32.mrf.mxu0
    %v786 = vadd.f32 0.0, %v785
    %787 = vmatprep.mubr.f32.mxu0 0.0
    %v788 = vand.u32 %v692, 4294901760
    %v789 = vsub.f32 %v692, %v788
    %v790 = vand.u32 %v789, 4294901760
    %v791 = vsub.f32 %v789, %v790
    %v792 = vand.u32 %v791, 4294901760
    %793 = vmatmul.mubr.f32.gmra.mxu0 %v792
    %v794 = vpop.f32.mrf.mxu0
    %v795 = vadd.f32 0.0, %v794
    %v796 = vpop.f32.mrf.mxu0
    %v797 = vadd.f32 0.0, %v796
    %798 = vmatprep.mubr.f32.mxu0 0.0
    %v799 = vand.u32 %v695, 4294901760
    %v800 = vsub.f32 %v695, %v799
    %v801 = vand.u32 %v800, 4294901760
    %v802 = vsub.f32 %v800, %v801
    %v803 = vand.u32 %v802, 4294901760
    %804 = vmatmul.mubr.f32.gmra.mxu0 %v803
    %v805 = vpop.f32.mrf.mxu0
    %v806 = vadd.f32 0.0, %v805
    %v807 = vpop.f32.mrf.mxu0
    %v808 = vadd.f32 0.0, %v807
    %809 = vdwg.mxu0
    %810 = vmatprep.subr.mxu0 0.0
    %811 = vmatpush1.msra.mxu0 0.0
    %812 = vmatprep.subr.mxu0 0.0
    %813 = vmatpush1.msra.mxu0 0.0
    %814 = vmatprep.subr.mxu0 0.0
    %815 = vmatpush1.msra.mxu0 0.0
    %816 = vmatprep.subr.mxu0 0.0
    %817 = vmatpush1.msra.mxu0 0.0
    %818 = vmatprep.subr.mxu0 0.0
    %819 = vmatpush1.msra.mxu0 0.0
    %820 = vmatprep.subr.mxu0 0.0
    %821 = vmatpush1.msra.mxu0 0.0
    %822 = vmatprep.subr.mxu0 0.0
    %823 = vmatpush1.msra.mxu0 0.0
    %824 = vmatprep.subr.mxu0 0.0
    %825 = vmatpush1.msra.mxu0 0.0
    %826 = vmatprep.subr.mxu0 0.0
    %827 = vmatpush1.msra.mxu0 0.0
    %828 = vmatprep.subr.mxu0 0.0
    %829 = vmatpush1.msra.mxu0 0.0
    %830 = vmatprep.subr.mxu0 0.0
    %831 = vmatpush1.msra.mxu0 0.0
    %832 = vmatprep.subr.mxu0 0.0
    %833 = vmatpush1.msra.mxu0 0.0
    %834 = vmatprep.subr.mxu0 0.0
    %835 = vmatpush1.msra.mxu0 0.0
    %836 = vmatprep.subr.mxu0 0.0
    %837 = vmatpush1.msra.mxu0 0.0
    %v838 = vand.u32 %v684, 4294901760
    %v839 = vsub.f32 %v684, %v838
    %v840 = vand.u32 %v839, 4294901760
    %v841 = vsub.f32 %v839, %v840
    %v842 = vand.u32 %v841, 4294901760
    %843 = vmatprep.subr.mxu0 %v842
    %v844 = vand.u32 %v683, 4294901760
    %v845 = vsub.f32 %v683, %v844
    %v846 = vand.u32 %v845, 4294901760
    %v847 = vsub.f32 %v845, %v846
    %v848 = vand.u32 %v847, 4294901760
    %849 = vmatpush1.msra.mxu0 %v848
    %v850 = vand.u32 %v682, 4294901760
    %v851 = vsub.f32 %v682, %v850
    %v852 = vand.u32 %v851, 4294901760
    %v853 = vsub.f32 %v851, %v852
    %v854 = vand.u32 %v853, 4294901760
    %855 = vmatprep.subr.mxu0 %v854
    %v856 = vand.u32 %v681, 4294901760
    %v857 = vsub.f32 %v681, %v856
    %v858 = vand.u32 %v857, 4294901760
    %v859 = vsub.f32 %v857, %v858
    %v860 = vand.u32 %v859, 4294901760
    %861 = vmatpush1.msra.mxu0 %v860
    %862 = vmatprep.subr.mxu0 0.0
    %863 = vmatpush2.msra.mxu0 0.0
    %864 = vmatprep.subr.mxu0 0.0
    %865 = vmatpush2.msra.mxu0 0.0
    %866 = vmatprep.subr.mxu0 0.0
    %867 = vmatpush2.msra.mxu0 0.0
    %868 = vmatprep.subr.mxu0 0.0
    %869 = vmatpush2.msra.mxu0 0.0
    %870 = vmatprep.subr.mxu0 0.0
    %871 = vmatpush2.msra.mxu0 0.0
    %872 = vmatprep.subr.mxu0 0.0
    %873 = vmatpush2.msra.mxu0 0.0
    %874 = vmatprep.subr.mxu0 0.0
    %875 = vmatpush2.msra.mxu0 0.0
    %876 = vmatprep.subr.mxu0 0.0
    %877 = vmatpush2.msra.mxu0 0.0
    %878 = vmatprep.subr.mxu0 0.0
    %879 = vmatpush2.msra.mxu0 0.0
    %880 = vmatprep.subr.mxu0 0.0
    %881 = vmatpush2.msra.mxu0 0.0
    %882 = vmatprep.subr.mxu0 0.0
    %883 = vmatpush2.msra.mxu0 0.0
    %884 = vmatprep.subr.mxu0 0.0
    %885 = vmatpush2.msra.mxu0 0.0
    %886 = vmatprep.subr.mxu0 0.0
    %887 = vmatpush2.msra.mxu0 0.0
    %888 = vmatprep.subr.mxu0 0.0
    %889 = vmatpush2.msra.mxu0 0.0
    %890 = vmatprep.subr.mxu0 0.0
    %891 = vmatpush2.msra.mxu0 0.0
    %892 = vmatprep.subr.mxu0 0.0
    %893 = vmatpush2.msra.mxu0 0.0
    %894 = vmatprep.mubr.f32.mxu0 0.0
    %v895 = vand.u32 %v686, 4294901760
    %896 = vmatmul.mubr.f32.gmra.mxu0 %v895
    %v897 = vpop.f32.mrf.mxu0
    %v898 = vadd.f32 %v773, %v897
    %v899 = vpop.f32.mrf.mxu0
    %v900 = vadd.f32 %v775, %v899
    %901 = vmatprep.mubr.f32.mxu0 0.0
    %v902 = vand.u32 %v689, 4294901760
    %903 = vmatmul.mubr.f32.gmra.mxu0 %v902
    %v904 = vpop.f32.mrf.mxu0
    %v905 = vadd.f32 %v784, %v904
    %v906 = vpop.f32.mrf.mxu0
    %v907 = vadd.f32 %v786, %v906
    %908 = vmatprep.mubr.f32.mxu0 0.0
    %v909 = vand.u32 %v692, 4294901760
    %910 = vmatmul.mubr.f32.gmra.mxu0 %v909
    %v911 = vpop.f32.mrf.mxu0
    %v912 = vadd.f32 %v795, %v911
    %v913 = vpop.f32.mrf.mxu0
    %v914 = vadd.f32 %v797, %v913
    %915 = vmatprep.mubr.f32.mxu0 0.0
    %v916 = vand.u32 %v695, 4294901760
    %917 = vmatmul.mubr.f32.gmra.mxu0 %v916
    %v918 = vpop.f32.mrf.mxu0
    %v919 = vadd.f32 %v806, %v918
    %v920 = vpop.f32.mrf.mxu0
    %v921 = vadd.f32 %v808, %v920
    %922 = vdwg.mxu0
    %923 = vmatprep.subr.mxu0 0.0
    %924 = vmatpush1.msra.mxu0 0.0
    %925 = vmatprep.subr.mxu0 0.0
    %926 = vmatpush1.msra.mxu0 0.0
    %927 = vmatprep.subr.mxu0 0.0
    %928 = vmatpush1.msra.mxu0 0.0
    %929 = vmatprep.subr.mxu0 0.0
    %930 = vmatpush1.msra.mxu0 0.0
    %931 = vmatprep.subr.mxu0 0.0
    %932 = vmatpush1.msra.mxu0 0.0
    %933 = vmatprep.subr.mxu0 0.0
    %934 = vmatpush1.msra.mxu0 0.0
    %935 = vmatprep.subr.mxu0 0.0
    %936 = vmatpush1.msra.mxu0 0.0
    %937 = vmatprep.subr.mxu0 0.0
    %938 = vmatpush1.msra.mxu0 0.0
    %939 = vmatprep.subr.mxu0 0.0
    %940 = vmatpush1.msra.mxu0 0.0
    %941 = vmatprep.subr.mxu0 0.0
    %942 = vmatpush1.msra.mxu0 0.0
    %943 = vmatprep.subr.mxu0 0.0
    %944 = vmatpush1.msra.mxu0 0.0
    %945 = vmatprep.subr.mxu0 0.0
    %946 = vmatpush1.msra.mxu0 0.0
    %947 = vmatprep.subr.mxu0 0.0
    %948 = vmatpush1.msra.mxu0 0.0
    %949 = vmatprep.subr.mxu0 0.0
    %950 = vmatpush1.msra.mxu0 0.0
    %v951 = vand.u32 %v684, 4294901760
    %v952 = vsub.f32 %v684, %v951
    %953 = vmatprep.subr.mxu0 %v952
    %v954 = vand.u32 %v683, 4294901760
    %v955 = vsub.f32 %v683, %v954
    %956 = vmatpush1.msra.mxu0 %v955
    %v957 = vand.u32 %v682, 4294901760
    %v958 = vsub.f32 %v682, %v957
    %959 = vmatprep.subr.mxu0 %v958
    %v960 = vand.u32 %v681, 4294901760
    %v961 = vsub.f32 %v681, %v960
    %962 = vmatpush1.msra.mxu0 %v961
    %963 = vmatprep.subr.mxu0 0.0
    %964 = vmatpush2.msra.mxu0 0.0
    %965 = vmatprep.subr.mxu0 0.0
    %966 = vmatpush2.msra.mxu0 0.0
    %967 = vmatprep.subr.mxu0 0.0
    %968 = vmatpush2.msra.mxu0 0.0
    %969 = vmatprep.subr.mxu0 0.0
    %970 = vmatpush2.msra.mxu0 0.0
    %971 = vmatprep.subr.mxu0 0.0
    %972 = vmatpush2.msra.mxu0 0.0
    %973 = vmatprep.subr.mxu0 0.0
    %974 = vmatpush2.msra.mxu0 0.0
    %975 = vmatprep.subr.mxu0 0.0
    %976 = vmatpush2.msra.mxu0 0.0
    %977 = vmatprep.subr.mxu0 0.0
    %978 = vmatpush2.msra.mxu0 0.0
    %979 = vmatprep.subr.mxu0 0.0
    %980 = vmatpush2.msra.mxu0 0.0
    %981 = vmatprep.subr.mxu0 0.0
    %982 = vmatpush2.msra.mxu0 0.0
    %983 = vmatprep.subr.mxu0 0.0
    %984 = vmatpush2.msra.mxu0 0.0
    %985 = vmatprep.subr.mxu0 0.0
    %986 = vmatpush2.msra.mxu0 0.0
    %987 = vmatprep.subr.mxu0 0.0
    %988 = vmatpush2.msra.mxu0 0.0
    %989 = vmatprep.subr.mxu0 0.0
    %990 = vmatpush2.msra.mxu0 0.0
    %991 = vmatprep.subr.mxu0 0.0
    %992 = vmatpush2.msra.mxu0 0.0
    %993 = vmatprep.subr.mxu0 0.0
    %994 = vmatpush2.msra.mxu0 0.0
    %995 = vmatprep.mubr.f32.mxu0 0.0
    %v996 = vand.u32 %v686, 4294901760
    %v997 = vsub.f32 %v686, %v996
    %998 = vmatmul.mubr.f32.gmra.mxu0 %v997
    %v999 = vpop.f32.mrf.mxu0
    %v1000 = vadd.f32 %v898, %v999
    %v1001 = vpop.f32.mrf.mxu0
    %v1002 = vadd.f32 %v900, %v1001
    %1003 = vmatprep.mubr.f32.mxu0 0.0
    %v1004 = vand.u32 %v689, 4294901760
    %v1005 = vsub.f32 %v689, %v1004
    %1006 = vmatmul.mubr.f32.gmra.mxu0 %v1005
    %v1007 = vpop.f32.mrf.mxu0
    %v1008 = vadd.f32 %v905, %v1007
    %v1009 = vpop.f32.mrf.mxu0
    %v1010 = vadd.f32 %v907, %v1009
    %1011 = vmatprep.mubr.f32.mxu0 0.0
    %v1012 = vand.u32 %v692, 4294901760
    %v1013 = vsub.f32 %v692, %v1012
    %1014 = vmatmul.mubr.f32.gmra.mxu0 %v1013
    %v1015 = vpop.f32.mrf.mxu0
    %v1016 = vadd.f32 %v912, %v1015
    %v1017 = vpop.f32.mrf.mxu0
    %v1018 = vadd.f32 %v914, %v1017
    %1019 = vmatprep.mubr.f32.mxu0 0.0
    %v1020 = vand.u32 %v695, 4294901760
    %v1021 = vsub.f32 %v695, %v1020
    %1022 = vmatmul.mubr.f32.gmra.mxu0 %v1021
    %v1023 = vpop.f32.mrf.mxu0
    %v1024 = vadd.f32 %v919, %v1023
    %v1025 = vpop.f32.mrf.mxu0
    %v1026 = vadd.f32 %v921, %v1025
    %1027 = vdwg.mxu0
    %1028 = vmatprep.subr.mxu0 0.0
    %1029 = vmatpush1.msra.mxu0 0.0
    %1030 = vmatprep.subr.mxu0 0.0
    %1031 = vmatpush1.msra.mxu0 0.0
    %1032 = vmatprep.subr.mxu0 0.0
    %1033 = vmatpush1.msra.mxu0 0.0
    %1034 = vmatprep.subr.mxu0 0.0
    %1035 = vmatpush1.msra.mxu0 0.0
    %1036 = vmatprep.subr.mxu0 0.0
    %1037 = vmatpush1.msra.mxu0 0.0
    %1038 = vmatprep.subr.mxu0 0.0
    %1039 = vmatpush1.msra.mxu0 0.0
    %1040 = vmatprep.subr.mxu0 0.0
    %1041 = vmatpush1.msra.mxu0 0.0
    %1042 = vmatprep.subr.mxu0 0.0
    %1043 = vmatpush1.msra.mxu0 0.0
    %1044 = vmatprep.subr.mxu0 0.0
    %1045 = vmatpush1.msra.mxu0 0.0
    %1046 = vmatprep.subr.mxu0 0.0
    %1047 = vmatpush1.msra.mxu0 0.0
    %1048 = vmatprep.subr.mxu0 0.0
    %1049 = vmatpush1.msra.mxu0 0.0
    %1050 = vmatprep.subr.mxu0 0.0
    %1051 = vmatpush1.msra.mxu0 0.0
    %1052 = vmatprep.subr.mxu0 0.0
    %1053 = vmatpush1.msra.mxu0 0.0
    %1054 = vmatprep.subr.mxu0 0.0
    %1055 = vmatpush1.msra.mxu0 0.0
    %v1056 = vand.u32 %v684, 4294901760
    %1057 = vmatprep.subr.mxu0 %v1056
    %v1058 = vand.u32 %v683, 4294901760
    %1059 = vmatpush1.msra.mxu0 %v1058
    %v1060 = vand.u32 %v682, 4294901760
    %1061 = vmatprep.subr.mxu0 %v1060
    %v1062 = vand.u32 %v681, 4294901760
    %1063 = vmatpush1.msra.mxu0 %v1062
    %1064 = vmatprep.subr.mxu0 0.0
    %1065 = vmatpush2.msra.mxu0 0.0
    %1066 = vmatprep.subr.mxu0 0.0
    %1067 = vmatpush2.msra.mxu0 0.0
    %1068 = vmatprep.subr.mxu0 0.0
    %1069 = vmatpush2.msra.mxu0 0.0
    %1070 = vmatprep.subr.mxu0 0.0
    %1071 = vmatpush2.msra.mxu0 0.0
    %1072 = vmatprep.subr.mxu0 0.0
    %1073 = vmatpush2.msra.mxu0 0.0
    %1074 = vmatprep.subr.mxu0 0.0
    %1075 = vmatpush2.msra.mxu0 0.0
    %1076 = vmatprep.subr.mxu0 0.0
    %1077 = vmatpush2.msra.mxu0 0.0
    %1078 = vmatprep.subr.mxu0 0.0
    %1079 = vmatpush2.msra.mxu0 0.0
    %1080 = vmatprep.subr.mxu0 0.0
    %1081 = vmatpush2.msra.mxu0 0.0
    %1082 = vmatprep.subr.mxu0 0.0
    %1083 = vmatpush2.msra.mxu0 0.0
    %1084 = vmatprep.subr.mxu0 0.0
    %1085 = vmatpush2.msra.mxu0 0.0
    %1086 = vmatprep.subr.mxu0 0.0
    %1087 = vmatpush2.msra.mxu0 0.0
    %1088 = vmatprep.subr.mxu0 0.0
    %1089 = vmatpush2.msra.mxu0 0.0
    %1090 = vmatprep.subr.mxu0 0.0
    %1091 = vmatpush2.msra.mxu0 0.0
    %1092 = vmatprep.subr.mxu0 0.0
    %1093 = vmatpush2.msra.mxu0 0.0
    %1094 = vmatprep.subr.mxu0 0.0
    %1095 = vmatpush2.msra.mxu0 0.0
    %1096 = vmatprep.mubr.f32.mxu0 0.0
    %v1097 = vand.u32 %v686, 4294901760
    %v1098 = vsub.f32 %v686, %v1097
    %v1099 = vand.u32 %v1098, 4294901760
    %1100 = vmatmul.mubr.f32.gmra.mxu0 %v1099
    %v1101 = vpop.f32.mrf.mxu0
    %v1102 = vadd.f32 %v1000, %v1101
    %v1103 = vpop.f32.mrf.mxu0
    %v1104 = vadd.f32 %v1002, %v1103
    %1105 = vmatprep.mubr.f32.mxu0 0.0
    %v1106 = vand.u32 %v689, 4294901760
    %v1107 = vsub.f32 %v689, %v1106
    %v1108 = vand.u32 %v1107, 4294901760
    %1109 = vmatmul.mubr.f32.gmra.mxu0 %v1108
    %v1110 = vpop.f32.mrf.mxu0
    %v1111 = vadd.f32 %v1008, %v1110
    %v1112 = vpop.f32.mrf.mxu0
    %v1113 = vadd.f32 %v1010, %v1112
    %1114 = vmatprep.mubr.f32.mxu0 0.0
    %v1115 = vand.u32 %v692, 4294901760
    %v1116 = vsub.f32 %v692, %v1115
    %v1117 = vand.u32 %v1116, 4294901760
    %1118 = vmatmul.mubr.f32.gmra.mxu0 %v1117
    %v1119 = vpop.f32.mrf.mxu0
    %v1120 = vadd.f32 %v1016, %v1119
    %v1121 = vpop.f32.mrf.mxu0
    %v1122 = vadd.f32 %v1018, %v1121
    %1123 = vmatprep.mubr.f32.mxu0 0.0
    %v1124 = vand.u32 %v695, 4294901760
    %v1125 = vsub.f32 %v695, %v1124
    %v1126 = vand.u32 %v1125, 4294901760
    %1127 = vmatmul.mubr.f32.gmra.mxu0 %v1126
    %v1128 = vpop.f32.mrf.mxu0
    %v1129 = vadd.f32 %v1024, %v1128
    %v1130 = vpop.f32.mrf.mxu0
    %v1131 = vadd.f32 %v1026, %v1130
    %1132 = vdwg.mxu0
    %1133 = vmatprep.subr.mxu0 0.0
    %1134 = vmatpush1.msra.mxu0 0.0
    %1135 = vmatprep.subr.mxu0 0.0
    %1136 = vmatpush1.msra.mxu0 0.0
    %1137 = vmatprep.subr.mxu0 0.0
    %1138 = vmatpush1.msra.mxu0 0.0
    %1139 = vmatprep.subr.mxu0 0.0
    %1140 = vmatpush1.msra.mxu0 0.0
    %1141 = vmatprep.subr.mxu0 0.0
    %1142 = vmatpush1.msra.mxu0 0.0
    %1143 = vmatprep.subr.mxu0 0.0
    %1144 = vmatpush1.msra.mxu0 0.0
    %1145 = vmatprep.subr.mxu0 0.0
    %1146 = vmatpush1.msra.mxu0 0.0
    %1147 = vmatprep.subr.mxu0 0.0
    %1148 = vmatpush1.msra.mxu0 0.0
    %1149 = vmatprep.subr.mxu0 0.0
    %1150 = vmatpush1.msra.mxu0 0.0
    %1151 = vmatprep.subr.mxu0 0.0
    %1152 = vmatpush1.msra.mxu0 0.0
    %1153 = vmatprep.subr.mxu0 0.0
    %1154 = vmatpush1.msra.mxu0 0.0
    %1155 = vmatprep.subr.mxu0 0.0
    %1156 = vmatpush1.msra.mxu0 0.0
    %1157 = vmatprep.subr.mxu0 0.0
    %1158 = vmatpush1.msra.mxu0 0.0
    %1159 = vmatprep.subr.mxu0 0.0
    %1160 = vmatpush1.msra.mxu0 0.0
    %v1161 = vand.u32 %v684, 4294901760
    %v1162 = vsub.f32 %v684, %v1161
    %v1163 = vand.u32 %v1162, 4294901760
    %1164 = vmatprep.subr.mxu0 %v1163
    %v1165 = vand.u32 %v683, 4294901760
    %v1166 = vsub.f32 %v683, %v1165
    %v1167 = vand.u32 %v1166, 4294901760
    %1168 = vmatpush1.msra.mxu0 %v1167
    %v1169 = vand.u32 %v682, 4294901760
    %v1170 = vsub.f32 %v682, %v1169
    %v1171 = vand.u32 %v1170, 4294901760
    %1172 = vmatprep.subr.mxu0 %v1171
    %v1173 = vand.u32 %v681, 4294901760
    %v1174 = vsub.f32 %v681, %v1173
    %v1175 = vand.u32 %v1174, 4294901760
    %1176 = vmatpush1.msra.mxu0 %v1175
    %1177 = vmatprep.subr.mxu0 0.0
    %1178 = vmatpush2.msra.mxu0 0.0
    %1179 = vmatprep.subr.mxu0 0.0
    %1180 = vmatpush2.msra.mxu0 0.0
    %1181 = vmatprep.subr.mxu0 0.0
    %1182 = vmatpush2.msra.mxu0 0.0
    %1183 = vmatprep.subr.mxu0 0.0
    %1184 = vmatpush2.msra.mxu0 0.0
    %1185 = vmatprep.subr.mxu0 0.0
    %1186 = vmatpush2.msra.mxu0 0.0
    %1187 = vmatprep.subr.mxu0 0.0
    %1188 = vmatpush2.msra.mxu0 0.0
    %1189 = vmatprep.subr.mxu0 0.0
    %1190 = vmatpush2.msra.mxu0 0.0
    %1191 = vmatprep.subr.mxu0 0.0
    %1192 = vmatpush2.msra.mxu0 0.0
    %1193 = vmatprep.subr.mxu0 0.0
    %1194 = vmatpush2.msra.mxu0 0.0
    %1195 = vmatprep.subr.mxu0 0.0
    %1196 = vmatpush2.msra.mxu0 0.0
    %1197 = vmatprep.subr.mxu0 0.0
    %1198 = vmatpush2.msra.mxu0 0.0
    %1199 = vmatprep.subr.mxu0 0.0
    %1200 = vmatpush2.msra.mxu0 0.0
    %1201 = vmatprep.subr.mxu0 0.0
    %1202 = vmatpush2.msra.mxu0 0.0
    %1203 = vmatprep.subr.mxu0 0.0
    %1204 = vmatpush2.msra.mxu0 0.0
    %1205 = vmatprep.subr.mxu0 0.0
    %1206 = vmatpush2.msra.mxu0 0.0
    %1207 = vmatprep.subr.mxu0 0.0
    %1208 = vmatpush2.msra.mxu0 0.0
    %1209 = vmatprep.mubr.f32.mxu0 0.0
    %v1210 = vand.u32 %v686, 4294901760
    %1211 = vmatmul.mubr.f32.gmra.mxu0 %v1210
    %v1212 = vpop.f32.mrf.mxu0
    %v1213 = vadd.f32 %v1102, %v1212
    %v1214 = vpop.f32.mrf.mxu0
    %v1215 = vadd.f32 %v1104, %v1214
    %1216 = vmatprep.mubr.f32.mxu0 0.0
    %v1217 = vand.u32 %v689, 4294901760
    %1218 = vmatmul.mubr.f32.gmra.mxu0 %v1217
    %v1219 = vpop.f32.mrf.mxu0
    %v1220 = vadd.f32 %v1111, %v1219
    %v1221 = vpop.f32.mrf.mxu0
    %v1222 = vadd.f32 %v1113, %v1221
    %1223 = vmatprep.mubr.f32.mxu0 0.0
    %v1224 = vand.u32 %v692, 4294901760
    %1225 = vmatmul.mubr.f32.gmra.mxu0 %v1224
    %v1226 = vpop.f32.mrf.mxu0
    %v1227 = vadd.f32 %v1120, %v1226
    %v1228 = vpop.f32.mrf.mxu0
    %v1229 = vadd.f32 %v1122, %v1228
    %1230 = vmatprep.mubr.f32.mxu0 0.0
    %v1231 = vand.u32 %v695, 4294901760
    %1232 = vmatmul.mubr.f32.gmra.mxu0 %v1231
    %v1233 = vpop.f32.mrf.mxu0
    %v1234 = vadd.f32 %v1129, %v1233
    %v1235 = vpop.f32.mrf.mxu0
    %v1236 = vadd.f32 %v1131, %v1235
    %1237 = vdwg.mxu0
    %1238 = vmatprep.subr.mxu0 0.0
    %1239 = vmatpush1.msra.mxu0 0.0
    %1240 = vmatprep.subr.mxu0 0.0
    %1241 = vmatpush1.msra.mxu0 0.0
    %1242 = vmatprep.subr.mxu0 0.0
    %1243 = vmatpush1.msra.mxu0 0.0
    %1244 = vmatprep.subr.mxu0 0.0
    %1245 = vmatpush1.msra.mxu0 0.0
    %1246 = vmatprep.subr.mxu0 0.0
    %1247 = vmatpush1.msra.mxu0 0.0
    %1248 = vmatprep.subr.mxu0 0.0
    %1249 = vmatpush1.msra.mxu0 0.0
    %1250 = vmatprep.subr.mxu0 0.0
    %1251 = vmatpush1.msra.mxu0 0.0
    %1252 = vmatprep.subr.mxu0 0.0
    %1253 = vmatpush1.msra.mxu0 0.0
    %1254 = vmatprep.subr.mxu0 0.0
    %1255 = vmatpush1.msra.mxu0 0.0
    %1256 = vmatprep.subr.mxu0 0.0
    %1257 = vmatpush1.msra.mxu0 0.0
    %1258 = vmatprep.subr.mxu0 0.0
    %1259 = vmatpush1.msra.mxu0 0.0
    %1260 = vmatprep.subr.mxu0 0.0
    %1261 = vmatpush1.msra.mxu0 0.0
    %1262 = vmatprep.subr.mxu0 0.0
    %1263 = vmatpush1.msra.mxu0 0.0
    %1264 = vmatprep.subr.mxu0 0.0
    %1265 = vmatpush1.msra.mxu0 0.0
    %v1266 = vand.u32 %v684, 4294901760
    %1267 = vmatprep.subr.mxu0 %v1266
    %v1268 = vand.u32 %v683, 4294901760
    %1269 = vmatpush1.msra.mxu0 %v1268
    %v1270 = vand.u32 %v682, 4294901760
    %1271 = vmatprep.subr.mxu0 %v1270
    %v1272 = vand.u32 %v681, 4294901760
    %1273 = vmatpush1.msra.mxu0 %v1272
    %1274 = vmatprep.subr.mxu0 0.0
    %1275 = vmatpush2.msra.mxu0 0.0
    %1276 = vmatprep.subr.mxu0 0.0
    %1277 = vmatpush2.msra.mxu0 0.0
    %1278 = vmatprep.subr.mxu0 0.0
    %1279 = vmatpush2.msra.mxu0 0.0
    %1280 = vmatprep.subr.mxu0 0.0
    %1281 = vmatpush2.msra.mxu0 0.0
    %1282 = vmatprep.subr.mxu0 0.0
    %1283 = vmatpush2.msra.mxu0 0.0
    %1284 = vmatprep.subr.mxu0 0.0
    %1285 = vmatpush2.msra.mxu0 0.0
    %1286 = vmatprep.subr.mxu0 0.0
    %1287 = vmatpush2.msra.mxu0 0.0
    %1288 = vmatprep.subr.mxu0 0.0
    %1289 = vmatpush2.msra.mxu0 0.0
    %1290 = vmatprep.subr.mxu0 0.0
    %1291 = vmatpush2.msra.mxu0 0.0
    %1292 = vmatprep.subr.mxu0 0.0
    %1293 = vmatpush2.msra.mxu0 0.0
    %1294 = vmatprep.subr.mxu0 0.0
    %1295 = vmatpush2.msra.mxu0 0.0
    %1296 = vmatprep.subr.mxu0 0.0
    %1297 = vmatpush2.msra.mxu0 0.0
    %1298 = vmatprep.subr.mxu0 0.0
    %1299 = vmatpush2.msra.mxu0 0.0
    %1300 = vmatprep.subr.mxu0 0.0
    %1301 = vmatpush2.msra.mxu0 0.0
    %1302 = vmatprep.subr.mxu0 0.0
    %1303 = vmatpush2.msra.mxu0 0.0
    %1304 = vmatprep.subr.mxu0 0.0
    %1305 = vmatpush2.msra.mxu0 0.0
    %1306 = vmatprep.mubr.f32.mxu0 0.0
    %v1307 = vand.u32 %v686, 4294901760
    %1308 = vmatmul.mubr.f32.gmra.mxu0 %v1307
    %v1309 = vpop.f32.mrf.mxu0
    %v1310 = vadd.f32 %v1213, %v1309
    %v1311 = vpop.f32.mrf.mxu0
    %v1312 = vadd.f32 %v1215, %v1311
    %1313 = vmatprep.mubr.f32.mxu0 0.0
    %v1314 = vand.u32 %v689, 4294901760
    %1315 = vmatmul.mubr.f32.gmra.mxu0 %v1314
    %v1316 = vpop.f32.mrf.mxu0
    %v1317 = vadd.f32 %v1220, %v1316
    %v1318 = vpop.f32.mrf.mxu0
    %v1319 = vadd.f32 %v1222, %v1318
    %1320 = vmatprep.mubr.f32.mxu0 0.0
    %v1321 = vand.u32 %v692, 4294901760
    %1322 = vmatmul.mubr.f32.gmra.mxu0 %v1321
    %v1323 = vpop.f32.mrf.mxu0
    %v1324 = vadd.f32 %v1227, %v1323
    %v1325 = vpop.f32.mrf.mxu0
    %v1326 = vadd.f32 %v1229, %v1325
    %1327 = vmatprep.mubr.f32.mxu0 0.0
    %v1328 = vand.u32 %v695, 4294901760
    %1329 = vmatmul.mubr.f32.gmra.mxu0 %v1328
    %v1330 = vpop.f32.mrf.mxu0
    %v1331 = vadd.f32 %v1234, %v1330
    %v1332 = vpop.f32.mrf.mxu0
    %v1333 = vadd.f32 %v1236, %v1332
    %1334 = vdwg.mxu0
    %1335 = vst [vmem:[#allocation2] sm:$0xff] %v652
    %1336 = vst [vmem:[#allocation2 + $0x8] sm:$0xff] %v654
    %1337 = vst [vmem:[#allocation2 + $0x10] sm:$0xff] %v659
    %1338 = vst [vmem:[#allocation2 + $0x18] sm:$0xff] %v661
    %1339 = vst [vmem:[#allocation2 + $0x20] sm:$0xff] %v666
    %1340 = vst [vmem:[#allocation2 + $0x28] sm:$0xff] %v668
    %1341 = vst [vmem:[#allocation2 + $0x30] sm:$0xff] %v673
    %1342 = vst [vmem:[#allocation2 + $0x38] sm:$0xff] %v675
    %1343 = vst [vmem:[#allocation2 + $0x40] sm:$0xff] %v1310
    %1344 = vst [vmem:[#allocation2 + $0x48] sm:$0xff] %v1312
    %1345 = vst [vmem:[#allocation2 + $0x50] sm:$0xff] %v1317
    %1346 = vst [vmem:[#allocation2 + $0x58] sm:$0xff] %v1319
    %1347 = vst [vmem:[#allocation2 + $0x60] sm:$0xff] %v1324
    %1348 = vst [vmem:[#allocation2 + $0x68] sm:$0xff] %v1326
    %1349 = vst [vmem:[#allocation2 + $0x70] sm:$0xff] %v1331
    %1350 = vst [vmem:[#allocation2 + $0x78] sm:$0xff] %v1333
    // Predicated region
    $region18: #{tpu_custom_call.1} parent=1 // pred_check
      _
    $region19: #{tpu_custom_call.1} parent=1 // pred_check_branch
      %1352 = sbr.rel (0) target = $region21
    $region20: #{tpu_custom_call.1} parent=1 // pred_region
      %s1354 = ssub.s32 2048, 2048
      %1355 = vsyncadd [#allocation3], %s1354
      %s1356 = sshll.u32 [#allocation2], 4
      %s1357 = int_to_ptr.vmem [resolvable:$true] %s1356
      %1362 = dma.vmem_to_hbm [thread:$0]  %s1357, 2048, %s4, [#allocation3], 256, 256, 16
    $region21: #{tpu_custom_call.1} parent=1 // pred_fallthru
      _
    // Predicated region
    $region22: #{tpu_custom_call.1} parent=1 // pred_check
      _
    $region23: #{tpu_custom_call.1} parent=1 // pred_check_branch
      %1364 = sbr.rel (0) target = $region25
    $region24: #{tpu_custom_call.1} parent=1 // pred_region
      %1365 = dma.done [#allocation3], 2048
    $region25: #{tpu_custom_call.1} parent=1 // pred_fallthru
      _
    %1366 = vsyncpa [#allocation3], 1

</llo_original>
